<compile_context>
chip_gen: v7x
topology: tpu7x:2x2x1
jax: 0.10.0
libtpu: 0.0.40
codegen_flags: <defaults>
</compile_context>

<pallas_src>
import jax
import jax.numpy as jnp
from jax import lax
from jax.experimental import pallas as pl
from jax.experimental.pallas import tpu as pltpu

# ---- small, module-consistent sizes (original: EMBEDDING_DIM=HIDDEN_DIM=100, vocab=20000) ----
VOCAB = 128          # MAX_NB_WORDS (scaled down)
EMB = 32             # EMBEDDING_DIM (scaled down)
HID = 32             # HIDDEN_DIM (scaled down)
NUM_CLASSES = 8      # target_size = len(labels_index) is 0 in the source; use a small positive value
C_PAD = 128          # lane-dense class dimension for the head / output store
BATCH = 8
SEQ = 8


def lstm_net_kernel(ids_ref, tabproj_ref, bias_ref, wblk_ref, wout_ref, bout_ref, out_ref):
    """Fused embedding-gather + 2-layer LSTM wavefront recurrence + classification head.

    ids_ref:     ((S+1)*B, 1) int32 time-major token ids; last B rows are -1 (bias-only pad step).
    tabproj_ref: (V, 8H) bf16  = embedding_table @ Wih0 in packed gate-column layout.
    bias_ref:    (1, 8H) f32   = [b0 | b1] in packed gate-column layout.
    wblk_ref:    (2H, 8H) bf16 wavefront weight [[Whh0, Wih1], [0, Whh1]] (packed columns).
    wout_ref:    (H, C_PAD) bf16, bout_ref: (1, C_PAD) f32 (padded lanes biased to -1e30).
    out_ref:     (B, C_PAD) f32 log-probabilities (first NUM_CLASSES lanes valid).

    Packed gate column order is [i0, i1, f0, f1, o0, o1, g0, g1] (each width H).
    """
    H = wblk_ref.shape[0] // 2
    B = out_ref.shape[0]
    V = tabproj_ref.shape[0]
    N = ids_ref.shape[0]
    S = N // B - 1

    # ---- in-kernel embedding gather fused with the hoisted layer-0 input projection ----
    # one-hot(ids) @ (table @ Wih0)  — single MXU matmul; pad rows (id = -1) select nothing,
    # so the final pad step carries only the biases.
    ids = ids_ref[...]                                              # (N, 1) int32
    vlane = lax.broadcasted_iota(jnp.int32, (N, V), 1)
    onehot = jnp.where(vlane == ids, 1.0, 0.0).astype(jnp.bfloat16)  # (N, V)
    gxb = jnp.dot(onehot, tabproj_ref[...],
                  preferred_element_type=jnp.float32) + bias_ref[...]   # (N, 8H) f32 value

    wblk = wblk_ref[...]                                            # (2H, 8H) bf16, vreg-resident

    def packed_act(pre, c):
        # pre: (B, 8H) packed pre-gates, c: (B, 2H) = [c_layer0 | c_layer1]
        sg = jax.nn.sigmoid(pre[:, :6 * H])                         # one EUP pass for all sigmoids
        i = sg[:, 0 * H:2 * H]
        f = sg[:, 2 * H:4 * H]
        o = sg[:, 4 * H:6 * H]
        g = jnp.tanh(pre[:, 6 * H:])                                # one tanh pass for both layers
        c_new = f * c + i * g
        return o * jnp.tanh(c_new), c_new

    # layer-0 lane mask (first H lanes 1, last H lanes 0) — kills the bogus layer-1 state
    # produced by the uniform step-0 prologue (layer 1 must start from zeros).
    mask0 = jnp.where(lax.broadcasted_iota(jnp.int32, (B, 2 * H), 1) < H, 1.0, 0.0)

    # ---- step 0: no recurrent contribution (h0(-1) = h1(-2) = 0) ----
    h, c = packed_act(gxb[0:B, :], jnp.zeros((B, 2 * H), jnp.float32))
    h = h * mask0
    c = c * mask0

    # ---- wavefront steps: step s computes layer-0 time s and layer-1 time s-1 with ONE matmul.
    # The final pad step (s == S, ids = -1 -> bias only) finishes layer-1 time S-1.
    for s in range(1, S + 1):
        z = jnp.dot(h.astype(jnp.bfloat16), wblk,
                    preferred_element_type=jnp.float32) + gxb[s * B:(s + 1) * B, :]
        h, c = packed_act(z, c)

    h1 = h[:, H:2 * H]                                              # layer-1 hidden at last time step

    # ---- head: hidden2tag + log_softmax over the lane-padded (128-wide) class dim ----
    logits = jnp.dot(h1.astype(jnp.bfloat16), wout_ref[...],
                     preferred_element_type=jnp.float32) + bout_ref[...]
    m = jnp.max(logits, axis=-1, keepdims=True)
    shifted = logits - m
    lse = jnp.log(jnp.sum(jnp.exp(shifted), axis=-1, keepdims=True))
    out_ref[...] = (shifted - lse).astype(out_ref.dtype)


def _gate_cols(w_t, layer):
    """Map transposed-PyTorch gate blocks [i, f, g, o] (along columns) into the packed
    wavefront column layout [i0, i1, f0, f1, o0, o1, g0, g1]; other layer's columns are zero."""
    i, f, g, o = jnp.split(w_t, 4, axis=1)
    z = jnp.zeros_like(i)
    blocks = (i, z, f, z, o, z, g, z) if layer == 0 else (z, i, z, f, z, o, z, g)
    return jnp.concatenate(blocks, axis=1)


def lstm_net_forward(sentence, params):
    """sentence: int32 (B, S). Returns (B, NUM_CLASSES) log-probabilities (eval mode)."""
    B, S = sentence.shape
    H = HID

    # ---- packed wavefront weights ----
    wih0 = _gate_cols(params["w_ih_l0"].T, 0)                       # (E, 8H)
    whh0 = _gate_cols(params["w_hh_l0"].T, 0)                       # (H, 8H)
    wih1 = _gate_cols(params["w_ih_l1"].T, 1)                       # (H, 8H)
    whh1 = _gate_cols(params["w_hh_l1"].T, 1)                       # (H, 8H)
    wblk = jnp.concatenate([whh0 + wih1, whh1], axis=0).astype(jnp.bfloat16)  # (2H, 8H)

    bias = (_gate_cols((params["b_ih_l0"] + params["b_hh_l0"])[None, :], 0)
            + _gate_cols((params["b_ih_l1"] + params["b_hh_l1"])[None, :], 1))  # (1, 8H) f32

    # Embedding gather folded into the hoisted layer-0 input projection: the kernel does
    # onehot(ids) @ (embedding @ Wih0_packed).
    # TODO(synk): nn.Dropout(p=0.2) is identity in eval mode; training-mode mask not implemented.
    tabproj = jnp.dot(params["embedding"], wih0).astype(jnp.bfloat16)            # (V, 8H)

    # Lane-dense head: pad the class dimension to 128; padded lanes get -1e30 bias so they
    # contribute ~0 to the softmax normalizer.
    wout = jnp.zeros((H, C_PAD), jnp.float32).at[:, :NUM_CLASSES].set(params["w_out"].T)
    wout = wout.astype(jnp.bfloat16)
    bout = jnp.full((1, C_PAD), -1e30, jnp.float32).at[0, :NUM_CLASSES].set(params["b_out"])

    # Time-major ids, plus one pad step of -1 ids (all-zero one-hot -> bias-only wavefront tail).
    ids = jnp.transpose(sentence, (1, 0)).reshape(S * B).astype(jnp.int32)
    ids = jnp.concatenate([ids, jnp.full((B,), -1, jnp.int32)]).reshape((S + 1) * B, 1)

    vmem = pl.BlockSpec(memory_space=pltpu.MemorySpace.VMEM)
    out = pl.pallas_call(
        lstm_net_kernel,
        out_shape=jax.ShapeDtypeStruct((B, C_PAD), jnp.float32),
        in_specs=[vmem] * 6,
        out_specs=vmem,
    )(ids, tabproj, bias, wblk, wout, bout)
    return out[:, :NUM_CLASSES]


def lstm_net_reference(sentence, params):
    """Pure-JAX (f32) reference matching the PyTorch module semantics (eval mode)."""
    emb = jnp.take(params["embedding"], sentence, axis=0).astype(jnp.float32)   # (B, S, E)
    B, S, _ = emb.shape
    H = HID

    def cell(x_t, h, c, wih, whh, b):
        gates = x_t @ wih.T + h @ whh.T + b
        i = jax.nn.sigmoid(gates[:, 0 * H:1 * H])
        f = jax.nn.sigmoid(gates[:, 1 * H:2 * H])
        g = jnp.tanh(gates[:, 2 * H:3 * H])
        o = jax.nn.sigmoid(gates[:, 3 * H:4 * H])
        c_new = f * c + i * g
        return o * jnp.tanh(c_new), c_new

    h0 = c0 = h1 = c1 = jnp.zeros((B, H), jnp.float32)
    for t in range(S):
        x_t = emb[:, t, :]
        h0, c0 = cell(x_t, h0, c0, params["w_ih_l0"], params["w_hh_l0"],
                      params["b_ih_l0"] + params["b_hh_l0"])
        h1, c1 = cell(h0, h1, c1, params["w_ih_l1"], params["w_hh_l1"],
                      params["b_ih_l1"] + params["b_hh_l1"])
    logits = h1 @ params["w_out"].T + params["b_out"]
    return jax.nn.log_softmax(logits, axis=-1)


def init_params(key):
    ks = jax.random.split(key, 12)
    bound = 1.0 / jnp.sqrt(HID)

    def u(k, shape):
        return jax.random.uniform(k, shape, jnp.float32, -bound, bound)

    return {
        "embedding": jax.random.normal(ks[0], (VOCAB, EMB), jnp.float32),
        "w_ih_l0": u(ks[1], (4 * HID, EMB)),
        "w_hh_l0": u(ks[2], (4 * HID, HID)),
        "b_ih_l0": u(ks[3], (4 * HID,)),
        "b_hh_l0": u(ks[4], (4 * HID,)),
        "w_ih_l1": u(ks[5], (4 * HID, HID)),
        "w_hh_l1": u(ks[6], (4 * HID, HID)),
        "b_ih_l1": u(ks[7], (4 * HID,)),
        "b_hh_l1": u(ks[8], (4 * HID,)),
        "w_out": u(ks[9], (NUM_CLASSES, HID)),
        "b_out": u(ks[10], (NUM_CLASSES,)),
    }


if __name__ == "__main__":
    key = jax.random.PRNGKey(0)
    pkey, dkey = jax.random.split(key)
    params = init_params(pkey)
    sentence = jax.random.randint(dkey, (BATCH, SEQ), 0, VOCAB, dtype=jnp.int32)

    log_probs = jax.jit(lambda s: lstm_net_forward(s, params))(sentence)
    log_probs = jax.block_until_ready(log_probs)

    # sanity: shape, finiteness, rows of exp(log_softmax) sum to ~1
    row_sums = jnp.sum(jnp.exp(log_probs), axis=-1)
    assert log_probs.shape == (BATCH, NUM_CLASSES)
    assert bool(jnp.all(jnp.isfinite(log_probs)))
    assert bool(jnp.allclose(row_sums, 1.0, atol=1e-3))

    # correctness vs pure-JAX f32 reference (tolerance loosened for bf16 MXU operands)
    ref = lstm_net_reference(sentence, params)
    assert bool(jnp.allclose(log_probs, ref, atol=5e-2, rtol=5e-2))

    print("KERNEL_OK")
</pallas_src>

<mosaic_0001>
module attributes {stable_mosaic.version = 11 : i64} {
  func.func @lstm_net_kernel(%arg0: memref<72x1xi32, #tpu.memory_space<vmem>>, %arg1: memref<128x256xbf16, #tpu.memory_space<vmem>>, %arg2: memref<1x256xf32, #tpu.memory_space<vmem>>, %arg3: memref<64x256xbf16, #tpu.memory_space<vmem>>, %arg4: memref<32x128xbf16, #tpu.memory_space<vmem>>, %arg5: memref<1x128xf32, #tpu.memory_space<vmem>>, %arg6: memref<8x128xf32, #tpu.memory_space<vmem>>) attributes {dimension_semantics = [], scalar_prefetch = 0 : i64, scratch_operands = 0 : i64, tpu.core_type = #tpu.core_type<tc>} {
    %c0 = arith.constant 0 : index
    %c0_0 = arith.constant 0 : index
    %0 = vector.load %arg0[%c0, %c0_0] : memref<72x1xi32, #tpu.memory_space<vmem>>, vector<72x1xi32>
    %1 = tpu.iota {dimensions = array<i32: 1>} : vector<72x128xi32>
    %2 = vector.broadcast %0 : vector<72x1xi32> to vector<72x128xi32>
    %3 = arith.cmpi eq, %1, %2 : vector<72x128xi32>
    %cst = arith.constant 1.000000e+00 : f32
    %cst_1 = arith.constant 0.000000e+00 : f32
    %4 = vector.broadcast %cst : f32 to vector<72x128xf32>
    %5 = vector.broadcast %cst_1 : f32 to vector<72x128xf32>
    %6 = arith.select %3, %4, %5 : vector<72x128xi1>, vector<72x128xf32>
    %7 = arith.truncf %6 : vector<72x128xf32> to vector<72x128xbf16>
    %c0_2 = arith.constant 0 : index
    %c0_3 = arith.constant 0 : index
    %8 = vector.load %arg1[%c0_2, %c0_3] : memref<128x256xbf16, #tpu.memory_space<vmem>>, vector<128x256xbf16>
    %cst_4 = arith.constant dense<0.000000e+00> : vector<72x256xf32>
    %9 = tpu.matmul %7, %8, %cst_4 {dimension_numbers = #tpu.dot_dimension_numbers<[1], [0], [0], [1], [0, 0, 1, 1], [], []>} : vector<72x128xbf16>, vector<128x256xbf16>, vector<72x256xf32> -> vector<72x256xf32>
    %c0_5 = arith.constant 0 : index
    %c0_6 = arith.constant 0 : index
    %10 = vector.load %arg2[%c0_5, %c0_6] : memref<1x256xf32, #tpu.memory_space<vmem>>, vector<1x256xf32>
    %11 = vector.broadcast %10 : vector<1x256xf32> to vector<72x256xf32>
    %12 = arith.addf %9, %11 : vector<72x256xf32>
    %c0_7 = arith.constant 0 : index
    %c0_8 = arith.constant 0 : index
    %13 = vector.load %arg3[%c0_7, %c0_8] : memref<64x256xbf16, #tpu.memory_space<vmem>>, vector<64x256xbf16>
    %14 = tpu.iota {dimensions = array<i32: 1>} : vector<8x64xi32>
    %c32_i32 = arith.constant 32 : i32
    %15 = vector.broadcast %c32_i32 : i32 to vector<8x64xi32>
    %16 = arith.cmpi slt, %14, %15 : vector<8x64xi32>
    %cst_9 = arith.constant 1.000000e+00 : f32
    %cst_10 = arith.constant 0.000000e+00 : f32
    %17 = vector.broadcast %cst_9 : f32 to vector<8x64xf32>
    %18 = vector.broadcast %cst_10 : f32 to vector<8x64xf32>
    %19 = arith.select %16, %17, %18 : vector<8x64xi1>, vector<8x64xf32>
    %20 = vector.extract_strided_slice %12 {offsets = [0, 0], sizes = [8, 256], strides = [1, 1]} : vector<72x256xf32> to vector<8x256xf32>
    %cst_11 = arith.constant 0.000000e+00 : f32
    %21 = vector.broadcast %cst_11 : f32 to vector<8x64xf32>
    %22 = vector.extract_strided_slice %20 {offsets = [0, 0], sizes = [8, 192], strides = [1, 1]} : vector<8x256xf32> to vector<8x192xf32>
    %23 = arith.negf %22 : vector<8x192xf32>
    %24 = math.exp %23 : vector<8x192xf32>
    %cst_12 = arith.constant 1.000000e+00 : f32
    %25 = vector.broadcast %cst_12 : f32 to vector<8x192xf32>
    %26 = arith.addf %25, %24 : vector<8x192xf32>
    %27 = arith.divf %25, %26 : vector<8x192xf32>
    %28 = vector.extract_strided_slice %27 {offsets = [0, 0], sizes = [8, 64], strides = [1, 1]} : vector<8x192xf32> to vector<8x64xf32>
    %29 = vector.extract_strided_slice %27 {offsets = [0, 64], sizes = [8, 64], strides = [1, 1]} : vector<8x192xf32> to vector<8x64xf32>
    %30 = vector.extract_strided_slice %27 {offsets = [0, 128], sizes = [8, 64], strides = [1, 1]} : vector<8x192xf32> to vector<8x64xf32>
    %31 = vector.extract_strided_slice %20 {offsets = [0, 192], sizes = [8, 64], strides = [1, 1]} : vector<8x256xf32> to vector<8x64xf32>
    %32 = math.tanh %31 : vector<8x64xf32>
    %33 = arith.mulf %29, %21 : vector<8x64xf32>
    %34 = arith.mulf %28, %32 : vector<8x64xf32>
    %35 = arith.addf %33, %34 : vector<8x64xf32>
    %36 = math.tanh %35 : vector<8x64xf32>
    %37 = arith.mulf %30, %36 : vector<8x64xf32>
    %38 = arith.mulf %37, %19 : vector<8x64xf32>
    %39 = arith.mulf %35, %19 : vector<8x64xf32>
    %40 = arith.truncf %38 : vector<8x64xf32> to vector<8x64xbf16>
    %cst_13 = arith.constant dense<0.000000e+00> : vector<8x256xf32>
    %41 = tpu.matmul %40, %13, %cst_13 {dimension_numbers = #tpu.dot_dimension_numbers<[1], [0], [0], [1], [0, 0, 1, 1], [], []>} : vector<8x64xbf16>, vector<64x256xbf16>, vector<8x256xf32> -> vector<8x256xf32>
    %42 = vector.extract_strided_slice %12 {offsets = [8, 0], sizes = [8, 256], strides = [1, 1]} : vector<72x256xf32> to vector<8x256xf32>
    %43 = arith.addf %41, %42 : vector<8x256xf32>
    %44 = vector.extract_strided_slice %43 {offsets = [0, 0], sizes = [8, 192], strides = [1, 1]} : vector<8x256xf32> to vector<8x192xf32>
    %45 = arith.negf %44 : vector<8x192xf32>
    %46 = math.exp %45 : vector<8x192xf32>
    %cst_14 = arith.constant 1.000000e+00 : f32
    %47 = vector.broadcast %cst_14 : f32 to vector<8x192xf32>
    %48 = arith.addf %47, %46 : vector<8x192xf32>
    %49 = arith.divf %47, %48 : vector<8x192xf32>
    %50 = vector.extract_strided_slice %49 {offsets = [0, 0], sizes = [8, 64], strides = [1, 1]} : vector<8x192xf32> to vector<8x64xf32>
    %51 = vector.extract_strided_slice %49 {offsets = [0, 64], sizes = [8, 64], strides = [1, 1]} : vector<8x192xf32> to vector<8x64xf32>
    %52 = vector.extract_strided_slice %49 {offsets = [0, 128], sizes = [8, 64], strides = [1, 1]} : vector<8x192xf32> to vector<8x64xf32>
    %53 = vector.extract_strided_slice %43 {offsets = [0, 192], sizes = [8, 64], strides = [1, 1]} : vector<8x256xf32> to vector<8x64xf32>
    %54 = math.tanh %53 : vector<8x64xf32>
    %55 = arith.mulf %51, %39 : vector<8x64xf32>
    %56 = arith.mulf %50, %54 : vector<8x64xf32>
    %57 = arith.addf %55, %56 : vector<8x64xf32>
    %58 = math.tanh %57 : vector<8x64xf32>
    %59 = arith.mulf %52, %58 : vector<8x64xf32>
    %60 = arith.truncf %59 : vector<8x64xf32> to vector<8x64xbf16>
    %cst_15 = arith.constant dense<0.000000e+00> : vector<8x256xf32>
    %61 = tpu.matmul %60, %13, %cst_15 {dimension_numbers = #tpu.dot_dimension_numbers<[1], [0], [0], [1], [0, 0, 1, 1], [], []>} : vector<8x64xbf16>, vector<64x256xbf16>, vector<8x256xf32> -> vector<8x256xf32>
    %62 = vector.extract_strided_slice %12 {offsets = [16, 0], sizes = [8, 256], strides = [1, 1]} : vector<72x256xf32> to vector<8x256xf32>
    %63 = arith.addf %61, %62 : vector<8x256xf32>
    %64 = vector.extract_strided_slice %63 {offsets = [0, 0], sizes = [8, 192], strides = [1, 1]} : vector<8x256xf32> to vector<8x192xf32>
    %65 = arith.negf %64 : vector<8x192xf32>
    %66 = math.exp %65 : vector<8x192xf32>
    %cst_16 = arith.constant 1.000000e+00 : f32
    %67 = vector.broadcast %cst_16 : f32 to vector<8x192xf32>
    %68 = arith.addf %67, %66 : vector<8x192xf32>
    %69 = arith.divf %67, %68 : vector<8x192xf32>
    %70 = vector.extract_strided_slice %69 {offsets = [0, 0], sizes = [8, 64], strides = [1, 1]} : vector<8x192xf32> to vector<8x64xf32>
    %71 = vector.extract_strided_slice %69 {offsets = [0, 64], sizes = [8, 64], strides = [1, 1]} : vector<8x192xf32> to vector<8x64xf32>
    %72 = vector.extract_strided_slice %69 {offsets = [0, 128], sizes = [8, 64], strides = [1, 1]} : vector<8x192xf32> to vector<8x64xf32>
    %73 = vector.extract_strided_slice %63 {offsets = [0, 192], sizes = [8, 64], strides = [1, 1]} : vector<8x256xf32> to vector<8x64xf32>
    %74 = math.tanh %73 : vector<8x64xf32>
    %75 = arith.mulf %71, %57 : vector<8x64xf32>
    %76 = arith.mulf %70, %74 : vector<8x64xf32>
    %77 = arith.addf %75, %76 : vector<8x64xf32>
    %78 = math.tanh %77 : vector<8x64xf32>
    %79 = arith.mulf %72, %78 : vector<8x64xf32>
    %80 = arith.truncf %79 : vector<8x64xf32> to vector<8x64xbf16>
    %cst_17 = arith.constant dense<0.000000e+00> : vector<8x256xf32>
    %81 = tpu.matmul %80, %13, %cst_17 {dimension_numbers = #tpu.dot_dimension_numbers<[1], [0], [0], [1], [0, 0, 1, 1], [], []>} : vector<8x64xbf16>, vector<64x256xbf16>, vector<8x256xf32> -> vector<8x256xf32>
    %82 = vector.extract_strided_slice %12 {offsets = [24, 0], sizes = [8, 256], strides = [1, 1]} : vector<72x256xf32> to vector<8x256xf32>
    %83 = arith.addf %81, %82 : vector<8x256xf32>
    %84 = vector.extract_strided_slice %83 {offsets = [0, 0], sizes = [8, 192], strides = [1, 1]} : vector<8x256xf32> to vector<8x192xf32>
    %85 = arith.negf %84 : vector<8x192xf32>
    %86 = math.exp %85 : vector<8x192xf32>
    %cst_18 = arith.constant 1.000000e+00 : f32
    %87 = vector.broadcast %cst_18 : f32 to vector<8x192xf32>
    %88 = arith.addf %87, %86 : vector<8x192xf32>
    %89 = arith.divf %87, %88 : vector<8x192xf32>
    %90 = vector.extract_strided_slice %89 {offsets = [0, 0], sizes = [8, 64], strides = [1, 1]} : vector<8x192xf32> to vector<8x64xf32>
    %91 = vector.extract_strided_slice %89 {offsets = [0, 64], sizes = [8, 64], strides = [1, 1]} : vector<8x192xf32> to vector<8x64xf32>
    %92 = vector.extract_strided_slice %89 {offsets = [0, 128], sizes = [8, 64], strides = [1, 1]} : vector<8x192xf32> to vector<8x64xf32>
    %93 = vector.extract_strided_slice %83 {offsets = [0, 192], sizes = [8, 64], strides = [1, 1]} : vector<8x256xf32> to vector<8x64xf32>
    %94 = math.tanh %93 : vector<8x64xf32>
    %95 = arith.mulf %91, %77 : vector<8x64xf32>
    %96 = arith.mulf %90, %94 : vector<8x64xf32>
    %97 = arith.addf %95, %96 : vector<8x64xf32>
    %98 = math.tanh %97 : vector<8x64xf32>
    %99 = arith.mulf %92, %98 : vector<8x64xf32>
    %100 = arith.truncf %99 : vector<8x64xf32> to vector<8x64xbf16>
    %cst_19 = arith.constant dense<0.000000e+00> : vector<8x256xf32>
    %101 = tpu.matmul %100, %13, %cst_19 {dimension_numbers = #tpu.dot_dimension_numbers<[1], [0], [0], [1], [0, 0, 1, 1], [], []>} : vector<8x64xbf16>, vector<64x256xbf16>, vector<8x256xf32> -> vector<8x256xf32>
    %102 = vector.extract_strided_slice %12 {offsets = [32, 0], sizes = [8, 256], strides = [1, 1]} : vector<72x256xf32> to vector<8x256xf32>
    %103 = arith.addf %101, %102 : vector<8x256xf32>
    %104 = vector.extract_strided_slice %103 {offsets = [0, 0], sizes = [8, 192], strides = [1, 1]} : vector<8x256xf32> to vector<8x192xf32>
    %105 = arith.negf %104 : vector<8x192xf32>
    %106 = math.exp %105 : vector<8x192xf32>
    %cst_20 = arith.constant 1.000000e+00 : f32
    %107 = vector.broadcast %cst_20 : f32 to vector<8x192xf32>
    %108 = arith.addf %107, %106 : vector<8x192xf32>
    %109 = arith.divf %107, %108 : vector<8x192xf32>
    %110 = vector.extract_strided_slice %109 {offsets = [0, 0], sizes = [8, 64], strides = [1, 1]} : vector<8x192xf32> to vector<8x64xf32>
    %111 = vector.extract_strided_slice %109 {offsets = [0, 64], sizes = [8, 64], strides = [1, 1]} : vector<8x192xf32> to vector<8x64xf32>
    %112 = vector.extract_strided_slice %109 {offsets = [0, 128], sizes = [8, 64], strides = [1, 1]} : vector<8x192xf32> to vector<8x64xf32>
    %113 = vector.extract_strided_slice %103 {offsets = [0, 192], sizes = [8, 64], strides = [1, 1]} : vector<8x256xf32> to vector<8x64xf32>
    %114 = math.tanh %113 : vector<8x64xf32>
    %115 = arith.mulf %111, %97 : vector<8x64xf32>
    %116 = arith.mulf %110, %114 : vector<8x64xf32>
    %117 = arith.addf %115, %116 : vector<8x64xf32>
    %118 = math.tanh %117 : vector<8x64xf32>
    %119 = arith.mulf %112, %118 : vector<8x64xf32>
    %120 = arith.truncf %119 : vector<8x64xf32> to vector<8x64xbf16>
    %cst_21 = arith.constant dense<0.000000e+00> : vector<8x256xf32>
    %121 = tpu.matmul %120, %13, %cst_21 {dimension_numbers = #tpu.dot_dimension_numbers<[1], [0], [0], [1], [0, 0, 1, 1], [], []>} : vector<8x64xbf16>, vector<64x256xbf16>, vector<8x256xf32> -> vector<8x256xf32>
    %122 = vector.extract_strided_slice %12 {offsets = [40, 0], sizes = [8, 256], strides = [1, 1]} : vector<72x256xf32> to vector<8x256xf32>
    %123 = arith.addf %121, %122 : vector<8x256xf32>
    %124 = vector.extract_strided_slice %123 {offsets = [0, 0], sizes = [8, 192], strides = [1, 1]} : vector<8x256xf32> to vector<8x192xf32>
    %125 = arith.negf %124 : vector<8x192xf32>
    %126 = math.exp %125 : vector<8x192xf32>
    %cst_22 = arith.constant 1.000000e+00 : f32
    %127 = vector.broadcast %cst_22 : f32 to vector<8x192xf32>
    %128 = arith.addf %127, %126 : vector<8x192xf32>
    %129 = arith.divf %127, %128 : vector<8x192xf32>
    %130 = vector.extract_strided_slice %129 {offsets = [0, 0], sizes = [8, 64], strides = [1, 1]} : vector<8x192xf32> to vector<8x64xf32>
    %131 = vector.extract_strided_slice %129 {offsets = [0, 64], sizes = [8, 64], strides = [1, 1]} : vector<8x192xf32> to vector<8x64xf32>
    %132 = vector.extract_strided_slice %129 {offsets = [0, 128], sizes = [8, 64], strides = [1, 1]} : vector<8x192xf32> to vector<8x64xf32>
    %133 = vector.extract_strided_slice %123 {offsets = [0, 192], sizes = [8, 64], strides = [1, 1]} : vector<8x256xf32> to vector<8x64xf32>
    %134 = math.tanh %133 : vector<8x64xf32>
    %135 = arith.mulf %131, %117 : vector<8x64xf32>
    %136 = arith.mulf %130, %134 : vector<8x64xf32>
    %137 = arith.addf %135, %136 : vector<8x64xf32>
    %138 = math.tanh %137 : vector<8x64xf32>
    %139 = arith.mulf %132, %138 : vector<8x64xf32>
    %140 = arith.truncf %139 : vector<8x64xf32> to vector<8x64xbf16>
    %cst_23 = arith.constant dense<0.000000e+00> : vector<8x256xf32>
    %141 = tpu.matmul %140, %13, %cst_23 {dimension_numbers = #tpu.dot_dimension_numbers<[1], [0], [0], [1], [0, 0, 1, 1], [], []>} : vector<8x64xbf16>, vector<64x256xbf16>, vector<8x256xf32> -> vector<8x256xf32>
    %142 = vector.extract_strided_slice %12 {offsets = [48, 0], sizes = [8, 256], strides = [1, 1]} : vector<72x256xf32> to vector<8x256xf32>
    %143 = arith.addf %141, %142 : vector<8x256xf32>
    %144 = vector.extract_strided_slice %143 {offsets = [0, 0], sizes = [8, 192], strides = [1, 1]} : vector<8x256xf32> to vector<8x192xf32>
    %145 = arith.negf %144 : vector<8x192xf32>
    %146 = math.exp %145 : vector<8x192xf32>
    %cst_24 = arith.constant 1.000000e+00 : f32
    %147 = vector.broadcast %cst_24 : f32 to vector<8x192xf32>
    %148 = arith.addf %147, %146 : vector<8x192xf32>
    %149 = arith.divf %147, %148 : vector<8x192xf32>
    %150 = vector.extract_strided_slice %149 {offsets = [0, 0], sizes = [8, 64], strides = [1, 1]} : vector<8x192xf32> to vector<8x64xf32>
    %151 = vector.extract_strided_slice %149 {offsets = [0, 64], sizes = [8, 64], strides = [1, 1]} : vector<8x192xf32> to vector<8x64xf32>
    %152 = vector.extract_strided_slice %149 {offsets = [0, 128], sizes = [8, 64], strides = [1, 1]} : vector<8x192xf32> to vector<8x64xf32>
    %153 = vector.extract_strided_slice %143 {offsets = [0, 192], sizes = [8, 64], strides = [1, 1]} : vector<8x256xf32> to vector<8x64xf32>
    %154 = math.tanh %153 : vector<8x64xf32>
    %155 = arith.mulf %151, %137 : vector<8x64xf32>
    %156 = arith.mulf %150, %154 : vector<8x64xf32>
    %157 = arith.addf %155, %156 : vector<8x64xf32>
    %158 = math.tanh %157 : vector<8x64xf32>
    %159 = arith.mulf %152, %158 : vector<8x64xf32>
    %160 = arith.truncf %159 : vector<8x64xf32> to vector<8x64xbf16>
    %cst_25 = arith.constant dense<0.000000e+00> : vector<8x256xf32>
    %161 = tpu.matmul %160, %13, %cst_25 {dimension_numbers = #tpu.dot_dimension_numbers<[1], [0], [0], [1], [0, 0, 1, 1], [], []>} : vector<8x64xbf16>, vector<64x256xbf16>, vector<8x256xf32> -> vector<8x256xf32>
    %162 = vector.extract_strided_slice %12 {offsets = [56, 0], sizes = [8, 256], strides = [1, 1]} : vector<72x256xf32> to vector<8x256xf32>
    %163 = arith.addf %161, %162 : vector<8x256xf32>
    %164 = vector.extract_strided_slice %163 {offsets = [0, 0], sizes = [8, 192], strides = [1, 1]} : vector<8x256xf32> to vector<8x192xf32>
    %165 = arith.negf %164 : vector<8x192xf32>
    %166 = math.exp %165 : vector<8x192xf32>
    %cst_26 = arith.constant 1.000000e+00 : f32
    %167 = vector.broadcast %cst_26 : f32 to vector<8x192xf32>
    %168 = arith.addf %167, %166 : vector<8x192xf32>
    %169 = arith.divf %167, %168 : vector<8x192xf32>
    %170 = vector.extract_strided_slice %169 {offsets = [0, 0], sizes = [8, 64], strides = [1, 1]} : vector<8x192xf32> to vector<8x64xf32>
    %171 = vector.extract_strided_slice %169 {offsets = [0, 64], sizes = [8, 64], strides = [1, 1]} : vector<8x192xf32> to vector<8x64xf32>
    %172 = vector.extract_strided_slice %169 {offsets = [0, 128], sizes = [8, 64], strides = [1, 1]} : vector<8x192xf32> to vector<8x64xf32>
    %173 = vector.extract_strided_slice %163 {offsets = [0, 192], sizes = [8, 64], strides = [1, 1]} : vector<8x256xf32> to vector<8x64xf32>
    %174 = math.tanh %173 : vector<8x64xf32>
    %175 = arith.mulf %171, %157 : vector<8x64xf32>
    %176 = arith.mulf %170, %174 : vector<8x64xf32>
    %177 = arith.addf %175, %176 : vector<8x64xf32>
    %178 = math.tanh %177 : vector<8x64xf32>
    %179 = arith.mulf %172, %178 : vector<8x64xf32>
    %180 = arith.truncf %179 : vector<8x64xf32> to vector<8x64xbf16>
    %cst_27 = arith.constant dense<0.000000e+00> : vector<8x256xf32>
    %181 = tpu.matmul %180, %13, %cst_27 {dimension_numbers = #tpu.dot_dimension_numbers<[1], [0], [0], [1], [0, 0, 1, 1], [], []>} : vector<8x64xbf16>, vector<64x256xbf16>, vector<8x256xf32> -> vector<8x256xf32>
    %182 = vector.extract_strided_slice %12 {offsets = [64, 0], sizes = [8, 256], strides = [1, 1]} : vector<72x256xf32> to vector<8x256xf32>
    %183 = arith.addf %181, %182 : vector<8x256xf32>
    %184 = vector.extract_strided_slice %183 {offsets = [0, 0], sizes = [8, 192], strides = [1, 1]} : vector<8x256xf32> to vector<8x192xf32>
    %185 = arith.negf %184 : vector<8x192xf32>
    %186 = math.exp %185 : vector<8x192xf32>
    %cst_28 = arith.constant 1.000000e+00 : f32
    %187 = vector.broadcast %cst_28 : f32 to vector<8x192xf32>
    %188 = arith.addf %187, %186 : vector<8x192xf32>
    %189 = arith.divf %187, %188 : vector<8x192xf32>
    %190 = vector.extract_strided_slice %189 {offsets = [0, 0], sizes = [8, 64], strides = [1, 1]} : vector<8x192xf32> to vector<8x64xf32>
    %191 = vector.extract_strided_slice %189 {offsets = [0, 64], sizes = [8, 64], strides = [1, 1]} : vector<8x192xf32> to vector<8x64xf32>
    %192 = vector.extract_strided_slice %189 {offsets = [0, 128], sizes = [8, 64], strides = [1, 1]} : vector<8x192xf32> to vector<8x64xf32>
    %193 = vector.extract_strided_slice %183 {offsets = [0, 192], sizes = [8, 64], strides = [1, 1]} : vector<8x256xf32> to vector<8x64xf32>
    %194 = math.tanh %193 : vector<8x64xf32>
    %195 = arith.mulf %191, %177 : vector<8x64xf32>
    %196 = arith.mulf %190, %194 : vector<8x64xf32>
    %197 = arith.addf %195, %196 : vector<8x64xf32>
    %198 = math.tanh %197 : vector<8x64xf32>
    %199 = arith.mulf %192, %198 : vector<8x64xf32>
    %200 = vector.extract_strided_slice %199 {offsets = [0, 32], sizes = [8, 32], strides = [1, 1]} : vector<8x64xf32> to vector<8x32xf32>
    %201 = arith.truncf %200 : vector<8x32xf32> to vector<8x32xbf16>
    %c0_29 = arith.constant 0 : index
    %c0_30 = arith.constant 0 : index
    %202 = vector.load %arg4[%c0_29, %c0_30] : memref<32x128xbf16, #tpu.memory_space<vmem>>, vector<32x128xbf16>
    %cst_31 = arith.constant dense<0.000000e+00> : vector<8x128xf32>
    %203 = tpu.matmul %201, %202, %cst_31 {dimension_numbers = #tpu.dot_dimension_numbers<[1], [0], [0], [1], [0, 0, 1, 1], [], []>} : vector<8x32xbf16>, vector<32x128xbf16>, vector<8x128xf32> -> vector<8x128xf32>
    %c0_32 = arith.constant 0 : index
    %c0_33 = arith.constant 0 : index
    %204 = vector.load %arg5[%c0_32, %c0_33] : memref<1x128xf32, #tpu.memory_space<vmem>>, vector<1x128xf32>
    %205 = vector.broadcast %204 : vector<1x128xf32> to vector<8x128xf32>
    %206 = arith.addf %203, %205 : vector<8x128xf32>
    %cst_34 = arith.constant dense<0xFF800000> : vector<8xf32>
    %207 = vector.multi_reduction <maximumf>, %206, %cst_34 [1] : vector<8x128xf32> to vector<8xf32>
    %208 = vector.shape_cast %207 : vector<8xf32> to vector<8x1xf32>
    %209 = vector.broadcast %208 : vector<8x1xf32> to vector<8x128xf32>
    %210 = arith.subf %206, %209 : vector<8x128xf32>
    %211 = math.exp %210 : vector<8x128xf32>
    %cst_35 = arith.constant dense<0.000000e+00> : vector<8xf32>
    %212 = vector.multi_reduction <add>, %211, %cst_35 [1] : vector<8x128xf32> to vector<8xf32>
    %213 = vector.shape_cast %212 : vector<8xf32> to vector<8x1xf32>
    %214 = math.log %213 : vector<8x1xf32>
    %215 = vector.broadcast %214 : vector<8x1xf32> to vector<8x128xf32>
    %216 = arith.subf %210, %215 : vector<8x128xf32>
    %c0_36 = arith.constant 0 : index
    %c0_37 = arith.constant 0 : index
    %217 = vector.load %arg6[%c0_36, %c0_37] : memref<8x128xf32, #tpu.memory_space<vmem>>, vector<8x128xf32>
    tpu.vector_store %arg6[%c0_36, %c0_37], %216 {strides = array<i32>} : memref<8x128xf32, #tpu.memory_space<vmem>>, vector<8x128xf32>,
    return
  }
}

</mosaic_0001>

<llo_original>
// kernel: _lambda_.1
$region0: #{_lambda_.1}
  #allocation0 [shape = 'u32[]', space=smem, size = 0x4, offset = 0x4, fixed_abs, tag = 'smem constant byte address 0x4 - core index']
  #allocation1 [shape = 'u32[144,128]{1,0:T(1,128)}', space=vmem, size = 0x12000, scoped, tag = 'internal scratch']
  %s0 = inlined_call_operand.vmem [shape: s32[72,1], index: 0, kind: input, shape index: {}]
  %s1 = inlined_call_operand.vmem [shape: bf16[128,256], index: 1, kind: input, shape index: {}]
  %s2 = inlined_call_operand.vmem [shape: f32[1,256], index: 2, kind: input, shape index: {}]
  %s3 = inlined_call_operand.vmem [shape: bf16[64,256], index: 3, kind: input, shape index: {}]
  %s4 = inlined_call_operand.vmem [shape: bf16[32,128], index: 4, kind: input, shape index: {}]
  %s5 = inlined_call_operand.vmem [shape: f32[1,128], index: 5, kind: input, shape index: {}]
  %s6 = inlined_call_operand.hbm [shape: f32[8,128], index: 6, kind: output, shape index: {}]
  %s7 = sld [smem:[#allocation0]]
  $region34: #{_lambda_.1} parent=0
    _
  %s9 = ssub.s32 1, %s7
  %s10 = scalar_select 0, %s9, %s7
  $region1: #{_lambda_.1} parent=0
    #allocation2 [shape = 'u8[4096]{0}', space=vmem, size = 0x1000, scoped, tag = 'output window, operand 0, single buffered']
    #allocation3 [shape = 's32[1]{0}', space=sflag, size = 0x4, scoped, tag = 'scoped memory for _lambda_.1']
    %11 = vsyncpa [#allocation3], 0
    // Predicated region
    $region2: #{_lambda_.1} parent=1 // pred_check
      _
    $region3: #{_lambda_.1} parent=1 // pred_check_branch
      %13 = sbr.rel (0) target = $region5
    $region4: #{_lambda_.1} parent=1 // pred_region
      _
    $region5: #{_lambda_.1} parent=1 // pred_fallthru
      _
    // Predicated region
    $region6: #{_lambda_.1} parent=1 // pred_check
      _
    $region7: #{_lambda_.1} parent=1 // pred_check_branch
      %15 = sbr.rel (0) target = $region9
    $region8: #{_lambda_.1} parent=1 // pred_region
      _
    $region9: #{_lambda_.1} parent=1 // pred_fallthru
      _
    // Predicated region
    $region10: #{_lambda_.1} parent=1 // pred_check
      _
    $region11: #{_lambda_.1} parent=1 // pred_check_branch
      %17 = sbr.rel (0) target = $region13
    $region12: #{_lambda_.1} parent=1 // pred_region
      _
    $region13: #{_lambda_.1} parent=1 // pred_fallthru
      _
    // Predicated region
    $region14: #{_lambda_.1} parent=1 // pred_check
      _
    $region15: #{_lambda_.1} parent=1 // pred_check_branch
      %19 = sbr.rel (0) target = $region17
    $region16: #{_lambda_.1} parent=1 // pred_region
      _
    $region17: #{_lambda_.1} parent=1 // pred_fallthru
      _
    // Predicated region
    $region18: #{_lambda_.1} parent=1 // pred_check
      _
    $region19: #{_lambda_.1} parent=1 // pred_check_branch
      %21 = sbr.rel (0) target = $region21
    $region20: #{_lambda_.1} parent=1 // pred_region
      _
    $region21: #{_lambda_.1} parent=1 // pred_fallthru
      _
    // Predicated region
    $region22: #{_lambda_.1} parent=1 // pred_check
      _
    $region23: #{_lambda_.1} parent=1 // pred_check_branch
      %23 = sbr.rel (0) target = $region25
    $region24: #{_lambda_.1} parent=1 // pred_region
      _
    $region25: #{_lambda_.1} parent=1 // pred_fallthru
      _
    %v25 = vld [vmem:[%s0] sm:$0xff]
    %v26 = vld [vmem:[%s0 + $0x8] sm:$0xff]
    %v27 = vld [vmem:[%s0 + $0x10] sm:$0xff]
    %v28 = vld [vmem:[%s0 + $0x18] sm:$0xff]
    %v29 = vld [vmem:[%s0 + $0x20] sm:$0xff]
    %v30 = vld [vmem:[%s0 + $0x28] sm:$0xff]
    %v31 = vld [vmem:[%s0 + $0x30] sm:$0xff]
    %v32 = vld [vmem:[%s0 + $0x38] sm:$0xff]
    %v33 = vld [vmem:[%s0 + $0x40] sm:$0xff]
    %v34 = vlaneseq
    %v35 = vand.u32 %v34, 127
    %36 = vset.pattern.permute.xlu0 0
    %37 = vperm.xlu0 %36, %v25
    %v38 = vpop.permute.xlu0 %37
    %39 = vset.pattern.permute.xlu0 0
    %40 = vperm.xlu0 %39, %v26
    %v41 = vpop.permute.xlu0 %40
    %42 = vset.pattern.permute.xlu0 0
    %43 = vperm.xlu0 %42, %v27
    %v44 = vpop.permute.xlu0 %43
    %45 = vset.pattern.permute.xlu0 0
    %46 = vperm.xlu0 %45, %v28
    %v47 = vpop.permute.xlu0 %46
    %48 = vset.pattern.permute.xlu0 0
    %49 = vperm.xlu0 %48, %v29
    %v50 = vpop.permute.xlu0 %49
    %51 = vset.pattern.permute.xlu0 0
    %52 = vperm.xlu0 %51, %v30
    %v53 = vpop.permute.xlu0 %52
    %54 = vset.pattern.permute.xlu0 0
    %55 = vperm.xlu0 %54, %v31
    %v56 = vpop.permute.xlu0 %55
    %57 = vset.pattern.permute.xlu0 0
    %58 = vperm.xlu0 %57, %v32
    %v59 = vpop.permute.xlu0 %58
    %60 = vset.pattern.permute.xlu0 0
    %61 = vperm.xlu0 %60, %v33
    %v62 = vpop.permute.xlu0 %61
    %vm63 = vcmp.eq.s32.totalorder %v35, %v38
    %vm64 = vcmp.eq.s32.totalorder %v35, %v41
    %vm65 = vcmp.eq.s32.totalorder %v35, %v44
    %vm66 = vcmp.eq.s32.totalorder %v35, %v47
    %vm67 = vcmp.eq.s32.totalorder %v35, %v50
    %vm68 = vcmp.eq.s32.totalorder %v35, %v53
    %vm69 = vcmp.eq.s32.totalorder %v35, %v56
    %vm70 = vcmp.eq.s32.totalorder %v35, %v59
    %vm71 = vcmp.eq.s32.totalorder %v35, %v62
    %v72 = vsel %vm63, 1.0, 0.0
    %v73 = vsel %vm64, 1.0, 0.0
    %v74 = vsel %vm65, 1.0, 0.0
    %v75 = vsel %vm66, 1.0, 0.0
    %v76 = vsel %vm67, 1.0, 0.0
    %v77 = vsel %vm68, 1.0, 0.0
    %v78 = vsel %vm69, 1.0, 0.0
    %v79 = vsel %vm70, 1.0, 0.0
    %v80 = vsel %vm71, 1.0, 0.0
    %v81 = vpack.c.bf16 %v73, %v72
    %v82 = vpack.c.bf16 %v75, %v74
    %v83 = vpack.c.bf16 %v77, %v76
    %v84 = vpack.c.bf16 %v79, %v78
    %v85 = vpack.c.bf16 %v80, %v80
    %v86 = vld [vmem:[%s1] sm:$0xff]
    %v87 = vld [vmem:[%s1 + $0x8] sm:$0xff]
    %v88 = vld [vmem:[%s1 + $0x10] sm:$0xff]
    %v89 = vld [vmem:[%s1 + $0x18] sm:$0xff]
    %v90 = vld [vmem:[%s1 + $0x20] sm:$0xff]
    %v91 = vld [vmem:[%s1 + $0x28] sm:$0xff]
    %v92 = vld [vmem:[%s1 + $0x30] sm:$0xff]
    %v93 = vld [vmem:[%s1 + $0x38] sm:$0xff]
    %v94 = vld [vmem:[%s1 + $0x40] sm:$0xff]
    %v95 = vld [vmem:[%s1 + $0x48] sm:$0xff]
    %v96 = vld [vmem:[%s1 + $0x50] sm:$0xff]
    %v97 = vld [vmem:[%s1 + $0x58] sm:$0xff]
    %v98 = vld [vmem:[%s1 + $0x60] sm:$0xff]
    %v99 = vld [vmem:[%s1 + $0x68] sm:$0xff]
    %v100 = vld [vmem:[%s1 + $0x70] sm:$0xff]
    %v101 = vld [vmem:[%s1 + $0x78] sm:$0xff]
    %v102 = vld [vmem:[%s2] sm:$0x3]
    %v104 = vlaneseq
    %v105 = vshrl.u32 %v104, 7
    %v106 = vsub.s32 0, %v105
    %v107 = vrot.slane %v102, %v106
    %v108 = vlaneseq
    %v109 = vshrl.u32 %v108, 7
    %v110 = vsub.s32 1, %v109
    %v111 = vrot.slane %v102, %v110
    %v130 = vunpack.c.l.b16 %v86
    %v131 = vunpack.c.h.b16 %v86
    %v132 = vunpack.c.l.b16 %v87
    %v133 = vunpack.c.h.b16 %v87
    %v134 = vunpack.c.l.b16 %v88
    %v135 = vunpack.c.h.b16 %v88
    %v136 = vunpack.c.l.b16 %v89
    %v137 = vunpack.c.h.b16 %v89
    %v138 = vunpack.c.l.b16 %v90
    %v139 = vunpack.c.h.b16 %v90
    %v140 = vunpack.c.l.b16 %v91
    %v141 = vunpack.c.h.b16 %v91
    %v142 = vunpack.c.l.b16 %v92
    %v143 = vunpack.c.h.b16 %v92
    %v144 = vunpack.c.l.b16 %v93
    %v145 = vunpack.c.h.b16 %v93
    %v146 = vunpack.c.l.b16 %v94
    %v147 = vunpack.c.h.b16 %v94
    %v148 = vunpack.c.l.b16 %v95
    %v149 = vunpack.c.h.b16 %v95
    %v150 = vunpack.c.l.b16 %v96
    %v151 = vunpack.c.h.b16 %v96
    %v152 = vunpack.c.l.b16 %v97
    %v153 = vunpack.c.h.b16 %v97
    %v154 = vunpack.c.l.b16 %v98
    %v155 = vunpack.c.h.b16 %v98
    %v156 = vunpack.c.l.b16 %v99
    %v157 = vunpack.c.h.b16 %v99
    %v158 = vunpack.c.l.b16 %v100
    %v159 = vunpack.c.h.b16 %v100
    %v160 = vunpack.c.l.b16 %v101
    %v161 = vunpack.c.h.b16 %v101
    %v162 = vpack.c.b16 %v132, %v130
    %v163 = vpack.c.b16 %v133, %v131
    %v164 = vpack.c.b16 %v136, %v134
    %v165 = vpack.c.b16 %v137, %v135
    %v166 = vpack.c.b16 %v140, %v138
    %v167 = vpack.c.b16 %v141, %v139
    %v168 = vpack.c.b16 %v144, %v142
    %v169 = vpack.c.b16 %v145, %v143
    %v170 = vpack.c.b16 %v148, %v146
    %v171 = vpack.c.b16 %v149, %v147
    %v172 = vpack.c.b16 %v152, %v150
    %v173 = vpack.c.b16 %v153, %v151
    %v174 = vpack.c.b16 %v156, %v154
    %v175 = vpack.c.b16 %v157, %v155
    %v176 = vpack.c.b16 %v160, %v158
    %v177 = vpack.c.b16 %v161, %v159
    %194 = vmatprep.subr.bf16.mxu0 %v163
    %195 = vmatpush1.bf16.msra.mxu0 %v162
    %196 = vmatprep.subr.bf16.mxu0 %v165
    %197 = vmatpush1.bf16.msra.mxu0 %v164
    %198 = vmatprep.subr.bf16.mxu0 %v167
    %199 = vmatpush1.bf16.msra.mxu0 %v166
    %200 = vmatprep.subr.bf16.mxu0 %v169
    %201 = vmatpush1.bf16.msra.mxu0 %v168
    %202 = vmatprep.subr.bf16.mxu0 %v171
    %203 = vmatpush1.bf16.msra.mxu0 %v170
    %204 = vmatprep.subr.bf16.mxu0 %v173
    %205 = vmatpush1.bf16.msra.mxu0 %v172
    %206 = vmatprep.subr.bf16.mxu0 %v175
    %207 = vmatpush1.bf16.msra.mxu0 %v174
    %208 = vmatprep.subr.bf16.mxu0 %v177
    %209 = vmatpush1.bf16.msra.mxu0 %v176
    %210 = vmatprep.subr.bf16.mxu0 0
    %211 = vmatpush1.bf16.msra.mxu0 0
    %212 = vmatprep.subr.bf16.mxu0 0
    %213 = vmatpush1.bf16.msra.mxu0 0
    %214 = vmatprep.subr.bf16.mxu0 0
    %215 = vmatpush1.bf16.msra.mxu0 0
    %216 = vmatprep.subr.bf16.mxu0 0
    %217 = vmatpush1.bf16.msra.mxu0 0
    %218 = vmatprep.subr.bf16.mxu0 0
    %219 = vmatpush1.bf16.msra.mxu0 0
    %220 = vmatprep.subr.bf16.mxu0 0
    %221 = vmatpush1.bf16.msra.mxu0 0
    %222 = vmatprep.subr.bf16.mxu0 0
    %223 = vmatpush1.bf16.msra.mxu0 0
    %224 = vmatprep.subr.bf16.mxu0 0
    %225 = vmatpush1.bf16.msra.mxu0 0
    %226 = vmatprep.mubr.bf16.mxu0 0
    %227 = vmatmul.mubr.bf16.gmra.mrb[0].mxu0 %v81
    %v228 = vpop.f32.mrb[0].mxu0
    %v229 = vadd.f32 %v107, %v228
    %v230 = vpop.f32.mrb[0].mxu0
    %v231 = vadd.f32 %v111, %v230
    %v232 = vpop.f32.mrb[0].mxu0
    %v233 = vadd.f32 %v107, %v232
    %v234 = vpop.f32.mrb[0].mxu0
    %v235 = vadd.f32 %v111, %v234
    %236 = vmatprep.mubr.bf16.mxu0 0
    %237 = vmatmul.mubr.bf16.gmra.mrb[0].mxu0 %v82
    %v238 = vpop.f32.mrb[0].mxu0
    %v239 = vadd.f32 %v107, %v238
    %v240 = vpop.f32.mrb[0].mxu0
    %v241 = vadd.f32 %v111, %v240
    %v242 = vpop.f32.mrb[0].mxu0
    %v243 = vadd.f32 %v107, %v242
    %v244 = vpop.f32.mrb[0].mxu0
    %v245 = vadd.f32 %v111, %v244
    %246 = vmatprep.mubr.bf16.mxu0 0
    %247 = vmatmul.mubr.bf16.gmra.mrb[0].mxu0 %v83
    %v248 = vpop.f32.mrb[0].mxu0
    %v249 = vadd.f32 %v107, %v248
    %v250 = vpop.f32.mrb[0].mxu0
    %v251 = vadd.f32 %v111, %v250
    %v252 = vpop.f32.mrb[0].mxu0
    %v253 = vadd.f32 %v107, %v252
    %v254 = vpop.f32.mrb[0].mxu0
    %v255 = vadd.f32 %v111, %v254
    %256 = vmatprep.mubr.bf16.mxu0 0
    %257 = vmatmul.mubr.bf16.gmra.mrb[0].mxu0 %v84
    %v258 = vpop.f32.mrb[0].mxu0
    %v259 = vadd.f32 %v107, %v258
    %v260 = vpop.f32.mrb[0].mxu0
    %v261 = vadd.f32 %v111, %v260
    %v262 = vpop.f32.mrb[0].mxu0
    %v263 = vadd.f32 %v107, %v262
    %v264 = vpop.f32.mrb[0].mxu0
    %v265 = vadd.f32 %v111, %v264
    %266 = vmatprep.mubr.bf16.mxu0 0
    %267 = vmatmul.mubr.bf16.gmra.mrb[0].mxu0 %v85
    %v268 = vpop.f32.mrb[0].mxu0
    %v269 = vadd.f32 %v107, %v268
    %v270 = vpop.f32.mrb[0].mxu0
    %v271 = vadd.f32 %v111, %v270
    %v272 = vpop.f32.mrb[0].mxu0
    %v273 = vpop.f32.mrb[0].mxu0
    %274 = vdwg.mxu0
    %v275 = vld [vmem:[%s3] sm:$0xff]
    %v276 = vld [vmem:[%s3 + $0x8] sm:$0xff]
    %v277 = vld [vmem:[%s3 + $0x10] sm:$0xff]
    %v278 = vld [vmem:[%s3 + $0x18] sm:$0xff]
    %v279 = vld [vmem:[%s3 + $0x20] sm:$0xff]
    %v280 = vld [vmem:[%s3 + $0x28] sm:$0xff]
    %v281 = vld [vmem:[%s3 + $0x30] sm:$0xff]
    %v282 = vld [vmem:[%s3 + $0x38] sm:$0xff]
    %vm283 = vcmp.lt.s32.totalorder %v35, 32
    %v284 = vsel %vm283, 1.0, 0.0
    %v285 = vxor.u32 %v229, 2147483648
    %v286 = vxor.u32 %v231, 2147483648
    %v287 = vmul.f32 %v285, 1.442695
    %v288 = vpow.pop %v287
    %v289 = vmul.f32 %v286, 1.442695
    %v290 = vpow.pop %v289
    %v291 = vadd.f32 %v288, 1.0
    %v292 = vadd.f32 %v290, 1.0
    %v293 = vrcp.pop %v291
    %v294 = vmul.f32 1.0, %v293
    %v295 = vrcp.pop %v292
    %v296 = vmul.f32 1.0, %v295
    %v297 = vtanh.pop %v231
    %v298 = vmul.f32 %v294, 0.0
    %300 = vrot.lane.b32.xlu0 %v297, 64
    %v301 = vpop.permute.xlu0 %300
    %v303 = vmul.f32 %v294, %v301
    %305 = vrot.lane.b32.xlu0 %v303, 64
    %v306 = vpop.permute.xlu0 %305
    %v308 = vadd.f32 %v298, %v306
    %v309 = vtanh.pop %v308
    %311 = vrot.lane.b32.xlu0 %v309, 64
    %v312 = vpop.permute.xlu0 %311
    %v314 = vmul.f32 %v296, %v312
    %v315 = vmul.f32 %v314, %v284
    %317 = vrot.lane.b32.xlu0 %v284, 64
    %v318 = vpop.permute.xlu0 %317
    %v320 = vmul.f32 %v308, %v318
    %v321 = vpack.c.bf16 %v315, %v315
    %v330 = vunpack.c.l.b16 %v275
    %v331 = vunpack.c.h.b16 %v275
    %v332 = vunpack.c.l.b16 %v276
    %v333 = vunpack.c.h.b16 %v276
    %v334 = vunpack.c.l.b16 %v277
    %v335 = vunpack.c.h.b16 %v277
    %v336 = vunpack.c.l.b16 %v278
    %v337 = vunpack.c.h.b16 %v278
    %v338 = vunpack.c.l.b16 %v279
    %v339 = vunpack.c.h.b16 %v279
    %v340 = vunpack.c.l.b16 %v280
    %v341 = vunpack.c.h.b16 %v280
    %v342 = vunpack.c.l.b16 %v281
    %v343 = vunpack.c.h.b16 %v281
    %v344 = vunpack.c.l.b16 %v282
    %v345 = vunpack.c.h.b16 %v282
    %v346 = vpack.c.b16 %v332, %v330
    %v347 = vpack.c.b16 %v333, %v331
    %v348 = vpack.c.b16 %v336, %v334
    %v349 = vpack.c.b16 %v337, %v335
    %v350 = vpack.c.b16 %v340, %v338
    %v351 = vpack.c.b16 %v341, %v339
    %v352 = vpack.c.b16 %v344, %v342
    %v353 = vpack.c.b16 %v345, %v343
    %vm362 = vcmask 523264
    %v364 = vsel %vm362, %v321, 0
    %366 = vmatprep.subr.bf16.mxu0 %v347
    %367 = vmatpush1.bf16.msra.mxu0 %v346
    %368 = vmatprep.subr.bf16.mxu0 %v349
    %369 = vmatpush1.bf16.msra.mxu0 %v348
    %370 = vmatprep.subr.bf16.mxu0 %v351
    %371 = vmatpush1.bf16.msra.mxu0 %v350
    %372 = vmatprep.subr.bf16.mxu0 %v353
    %373 = vmatpush1.bf16.msra.mxu0 %v352
    %374 = vmatprep.subr.bf16.mxu0 0
    %375 = vmatpush1.bf16.msra.mxu0 0
    %376 = vmatprep.subr.bf16.mxu0 0
    %377 = vmatpush1.bf16.msra.mxu0 0
    %378 = vmatprep.subr.bf16.mxu0 0
    %379 = vmatpush1.bf16.msra.mxu0 0
    %380 = vmatprep.subr.bf16.mxu0 0
    %381 = vmatpush1.bf16.msra.mxu0 0
    %382 = vmatprep.subr.bf16.mxu0 0
    %383 = vmatpush1.bf16.msra.mxu0 0
    %384 = vmatprep.subr.bf16.mxu0 0
    %385 = vmatpush1.bf16.msra.mxu0 0
    %386 = vmatprep.subr.bf16.mxu0 0
    %387 = vmatpush1.bf16.msra.mxu0 0
    %388 = vmatprep.subr.bf16.mxu0 0
    %389 = vmatpush1.bf16.msra.mxu0 0
    %390 = vmatprep.subr.bf16.mxu0 0
    %391 = vmatpush1.bf16.msra.mxu0 0
    %392 = vmatprep.subr.bf16.mxu0 0
    %393 = vmatpush1.bf16.msra.mxu0 0
    %394 = vmatprep.subr.bf16.mxu0 0
    %395 = vmatpush1.bf16.msra.mxu0 0
    %396 = vmatprep.subr.bf16.mxu0 0
    %397 = vmatpush1.bf16.msra.mxu0 0
    %398 = vmatprep.mubr.bf16.mxu0 0
    %399 = vmatmul.mubr.bf16.gmra.mrb[0].mxu0 %v364
    %v400 = vpop.f32.mrb[0].mxu0
    %v401 = vadd.f32 %v233, %v400
    %v402 = vpop.f32.mrb[0].mxu0
    %v403 = vadd.f32 %v235, %v402
    %v404 = vpop.f32.mrb[0].mxu0
    %v405 = vpop.f32.mrb[0].mxu0
    %406 = vdwg.mxu0
    %v407 = vxor.u32 %v401, 2147483648
    %v408 = vxor.u32 %v403, 2147483648
    %v409 = vmul.f32 %v407, 1.442695
    %v410 = vpow.pop %v409
    %v411 = vmul.f32 %v408, 1.442695
    %v412 = vpow.pop %v411
    %v413 = vadd.f32 %v410, 1.0
    %v414 = vadd.f32 %v412, 1.0
    %v415 = vrcp.pop %v413
    %v416 = vmul.f32 1.0, %v415
    %v417 = vrcp.pop %v414
    %v418 = vmul.f32 1.0, %v417
    %v419 = vtanh.pop %v403
    %v420 = vmul.f32 %v416, %v320
    %422 = vrot.lane.b32.xlu0 %v419, 64
    %v423 = vpop.permute.xlu0 %422
    %v425 = vmul.f32 %v416, %v423
    %427 = vrot.lane.b32.xlu0 %v425, 64
    %v428 = vpop.permute.xlu0 %427
    %v430 = vadd.f32 %v420, %v428
    %v431 = vtanh.pop %v430
    %433 = vrot.lane.b32.xlu0 %v431, 64
    %v434 = vpop.permute.xlu0 %433
    %v436 = vmul.f32 %v418, %v434
    %v437 = vpack.c.bf16 %v436, %v436
    %v439 = vsel %vm362, %v437, 0
    %441 = vmatprep.subr.bf16.mxu0 %v347
    %442 = vmatpush1.bf16.msra.mxu0 %v346
    %443 = vmatprep.subr.bf16.mxu0 %v349
    %444 = vmatpush1.bf16.msra.mxu0 %v348
    %445 = vmatprep.subr.bf16.mxu0 %v351
    %446 = vmatpush1.bf16.msra.mxu0 %v350
    %447 = vmatprep.subr.bf16.mxu0 %v353
    %448 = vmatpush1.bf16.msra.mxu0 %v352
    %449 = vmatprep.subr.bf16.mxu0 0
    %450 = vmatpush1.bf16.msra.mxu0 0
    %451 = vmatprep.subr.bf16.mxu0 0
    %452 = vmatpush1.bf16.msra.mxu0 0
    %453 = vmatprep.subr.bf16.mxu0 0
    %454 = vmatpush1.bf16.msra.mxu0 0
    %455 = vmatprep.subr.bf16.mxu0 0
    %456 = vmatpush1.bf16.msra.mxu0 0
    %457 = vmatprep.subr.bf16.mxu0 0
    %458 = vmatpush1.bf16.msra.mxu0 0
    %459 = vmatprep.subr.bf16.mxu0 0
    %460 = vmatpush1.bf16.msra.mxu0 0
    %461 = vmatprep.subr.bf16.mxu0 0
    %462 = vmatpush1.bf16.msra.mxu0 0
    %463 = vmatprep.subr.bf16.mxu0 0
    %464 = vmatpush1.bf16.msra.mxu0 0
    %465 = vmatprep.subr.bf16.mxu0 0
    %466 = vmatpush1.bf16.msra.mxu0 0
    %467 = vmatprep.subr.bf16.mxu0 0
    %468 = vmatpush1.bf16.msra.mxu0 0
    %469 = vmatprep.subr.bf16.mxu0 0
    %470 = vmatpush1.bf16.msra.mxu0 0
    %471 = vmatprep.subr.bf16.mxu0 0
    %472 = vmatpush1.bf16.msra.mxu0 0
    %473 = vmatprep.mubr.bf16.mxu0 0
    %474 = vmatmul.mubr.bf16.gmra.mrb[0].mxu0 %v439
    %v475 = vpop.f32.mrb[0].mxu0
    %v476 = vadd.f32 %v239, %v475
    %v477 = vpop.f32.mrb[0].mxu0
    %v478 = vadd.f32 %v241, %v477
    %v479 = vpop.f32.mrb[0].mxu0
    %v480 = vpop.f32.mrb[0].mxu0
    %481 = vdwg.mxu0
    %v482 = vxor.u32 %v476, 2147483648
    %v483 = vxor.u32 %v478, 2147483648
    %v484 = vmul.f32 %v482, 1.442695
    %v485 = vpow.pop %v484
    %v486 = vmul.f32 %v483, 1.442695
    %v487 = vpow.pop %v486
    %v488 = vadd.f32 %v485, 1.0
    %v489 = vadd.f32 %v487, 1.0
    %v490 = vrcp.pop %v488
    %v491 = vmul.f32 1.0, %v490
    %v492 = vrcp.pop %v489
    %v493 = vmul.f32 1.0, %v492
    %v494 = vtanh.pop %v478
    %v495 = vmul.f32 %v491, %v430
    %497 = vrot.lane.b32.xlu0 %v494, 64
    %v498 = vpop.permute.xlu0 %497
    %v500 = vmul.f32 %v491, %v498
    %502 = vrot.lane.b32.xlu0 %v500, 64
    %v503 = vpop.permute.xlu0 %502
    %v505 = vadd.f32 %v495, %v503
    %v506 = vtanh.pop %v505
    %508 = vrot.lane.b32.xlu0 %v506, 64
    %v509 = vpop.permute.xlu0 %508
    %v511 = vmul.f32 %v493, %v509
    %v512 = vpack.c.bf16 %v511, %v511
    %v514 = vsel %vm362, %v512, 0
    %516 = vmatprep.subr.bf16.mxu0 %v347
    %517 = vmatpush1.bf16.msra.mxu0 %v346
    %518 = vmatprep.subr.bf16.mxu0 %v349
    %519 = vmatpush1.bf16.msra.mxu0 %v348
    %520 = vmatprep.subr.bf16.mxu0 %v351
    %521 = vmatpush1.bf16.msra.mxu0 %v350
    %522 = vmatprep.subr.bf16.mxu0 %v353
    %523 = vmatpush1.bf16.msra.mxu0 %v352
    %524 = vmatprep.subr.bf16.mxu0 0
    %525 = vmatpush1.bf16.msra.mxu0 0
    %526 = vmatprep.subr.bf16.mxu0 0
    %527 = vmatpush1.bf16.msra.mxu0 0
    %528 = vmatprep.subr.bf16.mxu0 0
    %529 = vmatpush1.bf16.msra.mxu0 0
    %530 = vmatprep.subr.bf16.mxu0 0
    %531 = vmatpush1.bf16.msra.mxu0 0
    %532 = vmatprep.subr.bf16.mxu0 0
    %533 = vmatpush1.bf16.msra.mxu0 0
    %534 = vmatprep.subr.bf16.mxu0 0
    %535 = vmatpush1.bf16.msra.mxu0 0
    %536 = vmatprep.subr.bf16.mxu0 0
    %537 = vmatpush1.bf16.msra.mxu0 0
    %538 = vmatprep.subr.bf16.mxu0 0
    %539 = vmatpush1.bf16.msra.mxu0 0
    %540 = vmatprep.subr.bf16.mxu0 0
    %541 = vmatpush1.bf16.msra.mxu0 0
    %542 = vmatprep.subr.bf16.mxu0 0
    %543 = vmatpush1.bf16.msra.mxu0 0
    %544 = vmatprep.subr.bf16.mxu0 0
    %545 = vmatpush1.bf16.msra.mxu0 0
    %546 = vmatprep.subr.bf16.mxu0 0
    %547 = vmatpush1.bf16.msra.mxu0 0
    %548 = vmatprep.mubr.bf16.mxu0 0
    %549 = vmatmul.mubr.bf16.gmra.mrb[0].mxu0 %v514
    %v550 = vpop.f32.mrb[0].mxu0
    %v551 = vadd.f32 %v243, %v550
    %v552 = vpop.f32.mrb[0].mxu0
    %v553 = vadd.f32 %v245, %v552
    %v554 = vpop.f32.mrb[0].mxu0
    %v555 = vpop.f32.mrb[0].mxu0
    %556 = vdwg.mxu0
    %v557 = vxor.u32 %v551, 2147483648
    %v558 = vxor.u32 %v553, 2147483648
    %v559 = vmul.f32 %v557, 1.442695
    %v560 = vpow.pop %v559
    %v561 = vmul.f32 %v558, 1.442695
    %v562 = vpow.pop %v561
    %v563 = vadd.f32 %v560, 1.0
    %v564 = vadd.f32 %v562, 1.0
    %v565 = vrcp.pop %v563
    %v566 = vmul.f32 1.0, %v565
    %v567 = vrcp.pop %v564
    %v568 = vmul.f32 1.0, %v567
    %v569 = vtanh.pop %v553
    %v570 = vmul.f32 %v566, %v505
    %572 = vrot.lane.b32.xlu0 %v569, 64
    %v573 = vpop.permute.xlu0 %572
    %v575 = vmul.f32 %v566, %v573
    %577 = vrot.lane.b32.xlu0 %v575, 64
    %v578 = vpop.permute.xlu0 %577
    %v580 = vadd.f32 %v570, %v578
    %v581 = vtanh.pop %v580
    %583 = vrot.lane.b32.xlu0 %v581, 64
    %v584 = vpop.permute.xlu0 %583
    %v586 = vmul.f32 %v568, %v584
    %v587 = vpack.c.bf16 %v586, %v586
    %v589 = vsel %vm362, %v587, 0
    %591 = vmatprep.subr.bf16.mxu0 %v347
    %592 = vmatpush1.bf16.msra.mxu0 %v346
    %593 = vmatprep.subr.bf16.mxu0 %v349
    %594 = vmatpush1.bf16.msra.mxu0 %v348
    %595 = vmatprep.subr.bf16.mxu0 %v351
    %596 = vmatpush1.bf16.msra.mxu0 %v350
    %597 = vmatprep.subr.bf16.mxu0 %v353
    %598 = vmatpush1.bf16.msra.mxu0 %v352
    %599 = vmatprep.subr.bf16.mxu0 0
    %600 = vmatpush1.bf16.msra.mxu0 0
    %601 = vmatprep.subr.bf16.mxu0 0
    %602 = vmatpush1.bf16.msra.mxu0 0
    %603 = vmatprep.subr.bf16.mxu0 0
    %604 = vmatpush1.bf16.msra.mxu0 0
    %605 = vmatprep.subr.bf16.mxu0 0
    %606 = vmatpush1.bf16.msra.mxu0 0
    %607 = vmatprep.subr.bf16.mxu0 0
    %608 = vmatpush1.bf16.msra.mxu0 0
    %609 = vmatprep.subr.bf16.mxu0 0
    %610 = vmatpush1.bf16.msra.mxu0 0
    %611 = vmatprep.subr.bf16.mxu0 0
    %612 = vmatpush1.bf16.msra.mxu0 0
    %613 = vmatprep.subr.bf16.mxu0 0
    %614 = vmatpush1.bf16.msra.mxu0 0
    %615 = vmatprep.subr.bf16.mxu0 0
    %616 = vmatpush1.bf16.msra.mxu0 0
    %617 = vmatprep.subr.bf16.mxu0 0
    %618 = vmatpush1.bf16.msra.mxu0 0
    %619 = vmatprep.subr.bf16.mxu0 0
    %620 = vmatpush1.bf16.msra.mxu0 0
    %621 = vmatprep.subr.bf16.mxu0 0
    %622 = vmatpush1.bf16.msra.mxu0 0
    %623 = vmatprep.mubr.bf16.mxu0 0
    %624 = vmatmul.mubr.bf16.gmra.mrb[0].mxu0 %v589
    %v625 = vpop.f32.mrb[0].mxu0
    %v626 = vadd.f32 %v249, %v625
    %v627 = vpop.f32.mrb[0].mxu0
    %v628 = vadd.f32 %v251, %v627
    %v629 = vpop.f32.mrb[0].mxu0
    %v630 = vpop.f32.mrb[0].mxu0
    %631 = vdwg.mxu0
    %v632 = vxor.u32 %v626, 2147483648
    %v633 = vxor.u32 %v628, 2147483648
    %v634 = vmul.f32 %v632, 1.442695
    %v635 = vpow.pop %v634
    %v636 = vmul.f32 %v633, 1.442695
    %v637 = vpow.pop %v636
    %v638 = vadd.f32 %v635, 1.0
    %v639 = vadd.f32 %v637, 1.0
    %v640 = vrcp.pop %v638
    %v641 = vmul.f32 1.0, %v640
    %v642 = vrcp.pop %v639
    %v643 = vmul.f32 1.0, %v642
    %v644 = vtanh.pop %v628
    %v645 = vmul.f32 %v641, %v580
    %647 = vrot.lane.b32.xlu0 %v644, 64
    %v648 = vpop.permute.xlu0 %647
    %v650 = vmul.f32 %v641, %v648
    %652 = vrot.lane.b32.xlu0 %v650, 64
    %v653 = vpop.permute.xlu0 %652
    %v655 = vadd.f32 %v645, %v653
    %v656 = vtanh.pop %v655
    %658 = vrot.lane.b32.xlu0 %v656, 64
    %v659 = vpop.permute.xlu0 %658
    %v661 = vmul.f32 %v643, %v659
    %v662 = vpack.c.bf16 %v661, %v661
    %v664 = vsel %vm362, %v662, 0
    %666 = vmatprep.subr.bf16.mxu0 %v347
    %667 = vmatpush1.bf16.msra.mxu0 %v346
    %668 = vmatprep.subr.bf16.mxu0 %v349
    %669 = vmatpush1.bf16.msra.mxu0 %v348
    %670 = vmatprep.subr.bf16.mxu0 %v351
    %671 = vmatpush1.bf16.msra.mxu0 %v350
    %672 = vmatprep.subr.bf16.mxu0 %v353
    %673 = vmatpush1.bf16.msra.mxu0 %v352
    %674 = vmatprep.subr.bf16.mxu0 0
    %675 = vmatpush1.bf16.msra.mxu0 0
    %676 = vmatprep.subr.bf16.mxu0 0
    %677 = vmatpush1.bf16.msra.mxu0 0
    %678 = vmatprep.subr.bf16.mxu0 0
    %679 = vmatpush1.bf16.msra.mxu0 0
    %680 = vmatprep.subr.bf16.mxu0 0
    %681 = vmatpush1.bf16.msra.mxu0 0
    %682 = vmatprep.subr.bf16.mxu0 0
    %683 = vmatpush1.bf16.msra.mxu0 0
    %684 = vmatprep.subr.bf16.mxu0 0
    %685 = vmatpush1.bf16.msra.mxu0 0
    %686 = vmatprep.subr.bf16.mxu0 0
    %687 = vmatpush1.bf16.msra.mxu0 0
    %688 = vmatprep.subr.bf16.mxu0 0
    %689 = vmatpush1.bf16.msra.mxu0 0
    %690 = vmatprep.subr.bf16.mxu0 0
    %691 = vmatpush1.bf16.msra.mxu0 0
    %692 = vmatprep.subr.bf16.mxu0 0
    %693 = vmatpush1.bf16.msra.mxu0 0
    %694 = vmatprep.subr.bf16.mxu0 0
    %695 = vmatpush1.bf16.msra.mxu0 0
    %696 = vmatprep.subr.bf16.mxu0 0
    %697 = vmatpush1.bf16.msra.mxu0 0
    %698 = vmatprep.mubr.bf16.mxu0 0
    %699 = vmatmul.mubr.bf16.gmra.mrb[0].mxu0 %v664
    %v700 = vpop.f32.mrb[0].mxu0
    %v701 = vadd.f32 %v253, %v700
    %v702 = vpop.f32.mrb[0].mxu0
    %v703 = vadd.f32 %v255, %v702
    %v704 = vpop.f32.mrb[0].mxu0
    %v705 = vpop.f32.mrb[0].mxu0
    %706 = vdwg.mxu0
    %v707 = vxor.u32 %v701, 2147483648
    %v708 = vxor.u32 %v703, 2147483648
    %v709 = vmul.f32 %v707, 1.442695
    %v710 = vpow.pop %v709
    %v711 = vmul.f32 %v708, 1.442695
    %v712 = vpow.pop %v711
    %v713 = vadd.f32 %v710, 1.0
    %v714 = vadd.f32 %v712, 1.0
    %v715 = vrcp.pop %v713
    %v716 = vmul.f32 1.0, %v715
    %v717 = vrcp.pop %v714
    %v718 = vmul.f32 1.0, %v717
    %v719 = vtanh.pop %v703
    %v720 = vmul.f32 %v716, %v655
    %722 = vrot.lane.b32.xlu0 %v719, 64
    %v723 = vpop.permute.xlu0 %722
    %v725 = vmul.f32 %v716, %v723
    %727 = vrot.lane.b32.xlu0 %v725, 64
    %v728 = vpop.permute.xlu0 %727
    %v730 = vadd.f32 %v720, %v728
    %v731 = vtanh.pop %v730
    %733 = vrot.lane.b32.xlu0 %v731, 64
    %v734 = vpop.permute.xlu0 %733
    %v736 = vmul.f32 %v718, %v734
    %v737 = vpack.c.bf16 %v736, %v736
    %v739 = vsel %vm362, %v737, 0
    %741 = vmatprep.subr.bf16.mxu0 %v347
    %742 = vmatpush1.bf16.msra.mxu0 %v346
    %743 = vmatprep.subr.bf16.mxu0 %v349
    %744 = vmatpush1.bf16.msra.mxu0 %v348
    %745 = vmatprep.subr.bf16.mxu0 %v351
    %746 = vmatpush1.bf16.msra.mxu0 %v350
    %747 = vmatprep.subr.bf16.mxu0 %v353
    %748 = vmatpush1.bf16.msra.mxu0 %v352
    %749 = vmatprep.subr.bf16.mxu0 0
    %750 = vmatpush1.bf16.msra.mxu0 0
    %751 = vmatprep.subr.bf16.mxu0 0
    %752 = vmatpush1.bf16.msra.mxu0 0
    %753 = vmatprep.subr.bf16.mxu0 0
    %754 = vmatpush1.bf16.msra.mxu0 0
    %755 = vmatprep.subr.bf16.mxu0 0
    %756 = vmatpush1.bf16.msra.mxu0 0
    %757 = vmatprep.subr.bf16.mxu0 0
    %758 = vmatpush1.bf16.msra.mxu0 0
    %759 = vmatprep.subr.bf16.mxu0 0
    %760 = vmatpush1.bf16.msra.mxu0 0
    %761 = vmatprep.subr.bf16.mxu0 0
    %762 = vmatpush1.bf16.msra.mxu0 0
    %763 = vmatprep.subr.bf16.mxu0 0
    %764 = vmatpush1.bf16.msra.mxu0 0
    %765 = vmatprep.subr.bf16.mxu0 0
    %766 = vmatpush1.bf16.msra.mxu0 0
    %767 = vmatprep.subr.bf16.mxu0 0
    %768 = vmatpush1.bf16.msra.mxu0 0
    %769 = vmatprep.subr.bf16.mxu0 0
    %770 = vmatpush1.bf16.msra.mxu0 0
    %771 = vmatprep.subr.bf16.mxu0 0
    %772 = vmatpush1.bf16.msra.mxu0 0
    %773 = vmatprep.mubr.bf16.mxu0 0
    %774 = vmatmul.mubr.bf16.gmra.mrb[0].mxu0 %v739
    %v775 = vpop.f32.mrb[0].mxu0
    %v776 = vadd.f32 %v259, %v775
    %v777 = vpop.f32.mrb[0].mxu0
    %v778 = vadd.f32 %v261, %v777
    %v779 = vpop.f32.mrb[0].mxu0
    %v780 = vpop.f32.mrb[0].mxu0
    %781 = vdwg.mxu0
    %v782 = vxor.u32 %v776, 2147483648
    %v783 = vxor.u32 %v778, 2147483648
    %v784 = vmul.f32 %v782, 1.442695
    %v785 = vpow.pop %v784
    %v786 = vmul.f32 %v783, 1.442695
    %v787 = vpow.pop %v786
    %v788 = vadd.f32 %v785, 1.0
    %v789 = vadd.f32 %v787, 1.0
    %v790 = vrcp.pop %v788
    %v791 = vmul.f32 1.0, %v790
    %v792 = vrcp.pop %v789
    %v793 = vmul.f32 1.0, %v792
    %v794 = vtanh.pop %v778
    %v795 = vmul.f32 %v791, %v730
    %797 = vrot.lane.b32.xlu0 %v794, 64
    %v798 = vpop.permute.xlu0 %797
    %v800 = vmul.f32 %v791, %v798
    %802 = vrot.lane.b32.xlu0 %v800, 64
    %v803 = vpop.permute.xlu0 %802
    %v805 = vadd.f32 %v795, %v803
    %v806 = vtanh.pop %v805
    %808 = vrot.lane.b32.xlu0 %v806, 64
    %v809 = vpop.permute.xlu0 %808
    %v811 = vmul.f32 %v793, %v809
    %v812 = vpack.c.bf16 %v811, %v811
    %v814 = vsel %vm362, %v812, 0
    %816 = vmatprep.subr.bf16.mxu0 %v347
    %817 = vmatpush1.bf16.msra.mxu0 %v346
    %818 = vmatprep.subr.bf16.mxu0 %v349
    %819 = vmatpush1.bf16.msra.mxu0 %v348
    %820 = vmatprep.subr.bf16.mxu0 %v351
    %821 = vmatpush1.bf16.msra.mxu0 %v350
    %822 = vmatprep.subr.bf16.mxu0 %v353
    %823 = vmatpush1.bf16.msra.mxu0 %v352
    %824 = vmatprep.subr.bf16.mxu0 0
    %825 = vmatpush1.bf16.msra.mxu0 0
    %826 = vmatprep.subr.bf16.mxu0 0
    %827 = vmatpush1.bf16.msra.mxu0 0
    %828 = vmatprep.subr.bf16.mxu0 0
    %829 = vmatpush1.bf16.msra.mxu0 0
    %830 = vmatprep.subr.bf16.mxu0 0
    %831 = vmatpush1.bf16.msra.mxu0 0
    %832 = vmatprep.subr.bf16.mxu0 0
    %833 = vmatpush1.bf16.msra.mxu0 0
    %834 = vmatprep.subr.bf16.mxu0 0
    %835 = vmatpush1.bf16.msra.mxu0 0
    %836 = vmatprep.subr.bf16.mxu0 0
    %837 = vmatpush1.bf16.msra.mxu0 0
    %838 = vmatprep.subr.bf16.mxu0 0
    %839 = vmatpush1.bf16.msra.mxu0 0
    %840 = vmatprep.subr.bf16.mxu0 0
    %841 = vmatpush1.bf16.msra.mxu0 0
    %842 = vmatprep.subr.bf16.mxu0 0
    %843 = vmatpush1.bf16.msra.mxu0 0
    %844 = vmatprep.subr.bf16.mxu0 0
    %845 = vmatpush1.bf16.msra.mxu0 0
    %846 = vmatprep.subr.bf16.mxu0 0
    %847 = vmatpush1.bf16.msra.mxu0 0
    %848 = vmatprep.mubr.bf16.mxu0 0
    %849 = vmatmul.mubr.bf16.gmra.mrb[0].mxu0 %v814
    %v850 = vpop.f32.mrb[0].mxu0
    %v851 = vadd.f32 %v263, %v850
    %v852 = vpop.f32.mrb[0].mxu0
    %v853 = vadd.f32 %v265, %v852
    %v854 = vpop.f32.mrb[0].mxu0
    %v855 = vpop.f32.mrb[0].mxu0
    %856 = vdwg.mxu0
    %v857 = vxor.u32 %v851, 2147483648
    %v858 = vxor.u32 %v853, 2147483648
    %v859 = vmul.f32 %v857, 1.442695
    %v860 = vpow.pop %v859
    %v861 = vmul.f32 %v858, 1.442695
    %v862 = vpow.pop %v861
    %v863 = vadd.f32 %v860, 1.0
    %v864 = vadd.f32 %v862, 1.0
    %v865 = vrcp.pop %v863
    %v866 = vmul.f32 1.0, %v865
    %v867 = vrcp.pop %v864
    %v868 = vmul.f32 1.0, %v867
    %v869 = vtanh.pop %v853
    %v870 = vmul.f32 %v866, %v805
    %872 = vrot.lane.b32.xlu0 %v869, 64
    %v873 = vpop.permute.xlu0 %872
    %v875 = vmul.f32 %v866, %v873
    %877 = vrot.lane.b32.xlu0 %v875, 64
    %v878 = vpop.permute.xlu0 %877
    %v880 = vadd.f32 %v870, %v878
    %v881 = vtanh.pop %v880
    %883 = vrot.lane.b32.xlu0 %v881, 64
    %v884 = vpop.permute.xlu0 %883
    %v886 = vmul.f32 %v868, %v884
    %v887 = vpack.c.bf16 %v886, %v886
    %v889 = vsel %vm362, %v887, 0
    %891 = vmatprep.subr.bf16.mxu0 %v347
    %892 = vmatpush1.bf16.msra.mxu0 %v346
    %893 = vmatprep.subr.bf16.mxu0 %v349
    %894 = vmatpush1.bf16.msra.mxu0 %v348
    %895 = vmatprep.subr.bf16.mxu0 %v351
    %896 = vmatpush1.bf16.msra.mxu0 %v350
    %897 = vmatprep.subr.bf16.mxu0 %v353
    %898 = vmatpush1.bf16.msra.mxu0 %v352
    %899 = vmatprep.subr.bf16.mxu0 0
    %900 = vmatpush1.bf16.msra.mxu0 0
    %901 = vmatprep.subr.bf16.mxu0 0
    %902 = vmatpush1.bf16.msra.mxu0 0
    %903 = vmatprep.subr.bf16.mxu0 0
    %904 = vmatpush1.bf16.msra.mxu0 0
    %905 = vmatprep.subr.bf16.mxu0 0
    %906 = vmatpush1.bf16.msra.mxu0 0
    %907 = vmatprep.subr.bf16.mxu0 0
    %908 = vmatpush1.bf16.msra.mxu0 0
    %909 = vmatprep.subr.bf16.mxu0 0
    %910 = vmatpush1.bf16.msra.mxu0 0
    %911 = vmatprep.subr.bf16.mxu0 0
    %912 = vmatpush1.bf16.msra.mxu0 0
    %913 = vmatprep.subr.bf16.mxu0 0
    %914 = vmatpush1.bf16.msra.mxu0 0
    %915 = vmatprep.subr.bf16.mxu0 0
    %916 = vmatpush1.bf16.msra.mxu0 0
    %917 = vmatprep.subr.bf16.mxu0 0
    %918 = vmatpush1.bf16.msra.mxu0 0
    %919 = vmatprep.subr.bf16.mxu0 0
    %920 = vmatpush1.bf16.msra.mxu0 0
    %921 = vmatprep.subr.bf16.mxu0 0
    %922 = vmatpush1.bf16.msra.mxu0 0
    %923 = vmatprep.mubr.bf16.mxu0 0
    %924 = vmatmul.mubr.bf16.gmra.mrb[0].mxu0 %v889
    %v925 = vpop.f32.mrb[0].mxu0
    %v926 = vadd.f32 %v269, %v925
    %v927 = vpop.f32.mrb[0].mxu0
    %v928 = vadd.f32 %v271, %v927
    %v929 = vpop.f32.mrb[0].mxu0
    %v930 = vpop.f32.mrb[0].mxu0
    %931 = vdwg.mxu0
    %v932 = vxor.u32 %v926, 2147483648
    %v933 = vxor.u32 %v928, 2147483648
    %v934 = vmul.f32 %v932, 1.442695
    %v935 = vpow.pop %v934
    %v936 = vmul.f32 %v933, 1.442695
    %v937 = vpow.pop %v936
    %v938 = vadd.f32 %v935, 1.0
    %v939 = vadd.f32 %v937, 1.0
    %v940 = vrcp.pop %v938
    %v941 = vmul.f32 1.0, %v940
    %v942 = vrcp.pop %v939
    %v943 = vmul.f32 1.0, %v942
    %v944 = vtanh.pop %v928
    %v945 = vmul.f32 %v941, %v880
    %947 = vrot.lane.b32.xlu0 %v944, 64
    %v948 = vpop.permute.xlu0 %947
    %v950 = vmul.f32 %v941, %v948
    %952 = vrot.lane.b32.xlu0 %v950, 64
    %v953 = vpop.permute.xlu0 %952
    %v955 = vadd.f32 %v945, %v953
    %v956 = vtanh.pop %v955
    %958 = vrot.lane.b32.xlu0 %v956, 64
    %v959 = vpop.permute.xlu0 %958
    %v961 = vmul.f32 %v943, %v959
    %v962 = vpack.c.bf16 %v961, %v961
    %v963 = vld [vmem:[%s4] sm:$0xf]
    %v964 = vld [vmem:[%s4 + $0x4] sm:$0xf]
    %v965 = vld [vmem:[%s4 + $0x8] sm:$0xf]
    %v966 = vld [vmem:[%s4 + $0xc] sm:$0xf]
    %v967 = vld [vmem:[%s5] sm:$0x1]
    %v969 = vlaneseq
    %v970 = vshrl.u32 %v969, 7
    %v971 = vsub.s32 0, %v970
    %v972 = vrot.slane %v967, %v971
    %975 = vrot.lane.b32.xlu0 %v962, 96
    %v976 = vpop.permute.xlu0 %975
    %v981 = vunpack.c.l.b16 %v963
    %v982 = vunpack.c.l.b16 %v964
    %v983 = vunpack.c.l.b16 %v965
    %v984 = vunpack.c.l.b16 %v966
    %v985 = vpack.c.b16 %v982, %v981
    %v986 = vpack.c.b16 %v984, %v983
    %vm989 = vcmask 261120
    %v991 = vsel %vm989, %v976, 0
    %993 = vmatprep.subr.bf16.mxu0 0
    %994 = vmatpush1.bf16.msra.mxu0 %v985
    %995 = vmatprep.subr.bf16.mxu0 0
    %996 = vmatpush1.bf16.msra.mxu0 %v986
    %997 = vmatprep.subr.bf16.mxu0 0
    %998 = vmatpush1.bf16.msra.mxu0 0
    %999 = vmatprep.subr.bf16.mxu0 0
    %1000 = vmatpush1.bf16.msra.mxu0 0
    %1001 = vmatprep.subr.bf16.mxu0 0
    %1002 = vmatpush1.bf16.msra.mxu0 0
    %1003 = vmatprep.subr.bf16.mxu0 0
    %1004 = vmatpush1.bf16.msra.mxu0 0
    %1005 = vmatprep.subr.bf16.mxu0 0
    %1006 = vmatpush1.bf16.msra.mxu0 0
    %1007 = vmatprep.subr.bf16.mxu0 0
    %1008 = vmatpush1.bf16.msra.mxu0 0
    %1009 = vmatprep.subr.bf16.mxu0 0
    %1010 = vmatpush1.bf16.msra.mxu0 0
    %1011 = vmatprep.subr.bf16.mxu0 0
    %1012 = vmatpush1.bf16.msra.mxu0 0
    %1013 = vmatprep.subr.bf16.mxu0 0
    %1014 = vmatpush1.bf16.msra.mxu0 0
    %1015 = vmatprep.subr.bf16.mxu0 0
    %1016 = vmatpush1.bf16.msra.mxu0 0
    %1017 = vmatprep.subr.bf16.mxu0 0
    %1018 = vmatpush1.bf16.msra.mxu0 0
    %1019 = vmatprep.subr.bf16.mxu0 0
    %1020 = vmatpush1.bf16.msra.mxu0 0
    %1021 = vmatprep.subr.bf16.mxu0 0
    %1022 = vmatpush1.bf16.msra.mxu0 0
    %1023 = vmatprep.subr.bf16.mxu0 0
    %1024 = vmatpush1.bf16.msra.mxu0 0
    %1025 = vmatprep.mubr.bf16.mxu0 0
    %1026 = vmatmul.mubr.bf16.gmra.mrb[0].mxu0 %v991
    %v1027 = vpop.f32.mrb[0].mxu0
    %v1028 = vadd.f32 %v972, %v1027
    %v1029 = vpop.f32.mrb[0].mxu0
    %v1030 = vpop.f32.mrb[0].mxu0
    %v1031 = vpop.f32.mrb[0].mxu0
    %1032 = vdwg.mxu0
    %1033 = vmax.xlane.f32.xlu0 %v1028
    %v1034 = vpop.xlane.xlu0 %1033
    %v1035 = vsub.f32 %v1028, %v1034
    %v1036 = vmul.f32 %v1035, 1.442695
    %v1037 = vpow.pop %v1036
    %1038 = vadd.xlane.f32.xlu0 %v1037
    %v1039 = vpop.xlane.xlu0 %1038
    %v1040 = vlog2.pop %v1039
    %v1041 = vmul.f32 %v1040, 0.6931472
    %v1042 = vsub.f32 %v1035, %v1041
    %1043 = vst [vmem:[#allocation2] sm:$0xff] %v1042
    // Predicated region
    $region26: #{_lambda_.1} parent=1 // pred_check
      _
    $region27: #{_lambda_.1} parent=1 // pred_check_branch
      %1045 = sbr.rel (0) target = $region29
    $region28: #{_lambda_.1} parent=1 // pred_region
      %s1047 = ssub.s32 128, 128
      %1048 = vsyncadd [#allocation3], %s1047
      %s1050 = sshll.u32 [#allocation2], 4
      %s1051 = int_to_ptr.vmem [resolvable:$true] %s1050
      %1053 = dma.vmem_to_hbm [thread:$0]  %s1051, 128, %s6, [#allocation3]
    $region29: #{_lambda_.1} parent=1 // pred_fallthru
      _
    // Predicated region
    $region30: #{_lambda_.1} parent=1 // pred_check
      _
    $region31: #{_lambda_.1} parent=1 // pred_check_branch
      %1055 = sbr.rel (0) target = $region33
    $region32: #{_lambda_.1} parent=1 // pred_region
      %1056 = dma.done [#allocation3], 128
    $region33: #{_lambda_.1} parent=1 // pred_fallthru
      _
    %1057 = vsyncpa [#allocation3], 1

</llo_original>
